<compile_context>
chip_gen: v7x
topology: tpu7x:2x2x1
jax: 0.10.0
libtpu: 0.0.40
codegen_flags: <defaults>
</compile_context>

<pallas_src>
import jax
import jax.numpy as jnp
from jax.experimental import pallas as pl
from jax.experimental.pallas import tpu as pltpu


def _dma_copy_kernel(x_ref, o_ref, sem):
    # Pure data movement: one big HBM->HBM DMA per grid step (chunk).
    i = pl.program_id(0)
    cp = pltpu.make_async_copy(x_ref.at[i], o_ref.at[i], sem)
    cp.start()
    cp.wait()


def _pick_lane_width(total: int, fallback: int) -> int:
    """Largest lane-dense row length (multiple of 128) dividing `total`,
    preferring one that leaves >= 8 rows so the copy can be chunked."""
    candidates = (32768, 16384, 8192, 4096, 2048, 1024, 512, 256, 128)
    for cand in candidates:
        if total % cand == 0 and total // cand >= 8:
            return cand
    for cand in candidates:
        if total % cand == 0:
            return cand
    return fallback


def _largest_divisor_leq(n: int, cap: int) -> int:
    for d in range(min(cap, n), 0, -1):
        if n % d == 0:
            return d
    return 1


def shared_objects_to_batch_view(x: jax.Array, num_objects: int) -> jax.Array:
    """Zero-cost path (preferred in real use): XLA bitcasts this reshape."""
    B, OC, H, W = x.shape
    C = OC // num_objects
    return x.reshape(B * num_objects, C, H, W)


def shared_objects_to_batch(x: jax.Array, num_objects: int) -> jax.Array:
    """Pallas path: x (B, O*C, H, W) -> (B*O, C, H, W), identical to
    rearrange(x, 'b (o c) h w -> (b o) c h w', o=num_objects)."""
    B, OC, H, W = x.shape
    O = num_objects
    assert OC % O == 0, (OC, O)
    C = OC // O
    N = B * O                  # output batch (b o)
    F = C * H * W              # contiguous per-(b, o) feature slab (c h w)
    total = N * F

    # Lane-dense 2D view (R, L), decoupled from (C, H, W); free under the
    # default row-major layout because the buffer is fully contiguous.
    L = _pick_lane_width(total, F)
    R = total // L

    # Small chunked grid: >= 2 chunks (when R allows) so v7x's two TensorCores
    # each drive DMAs; each chunk is a single large contiguous HBM->HBM burst.
    n_chunks = _largest_divisor_leq(R, 8)
    rows_per_chunk = R // n_chunks

    x3 = x.reshape(n_chunks, rows_per_chunk, L)   # metadata-only

    itemsize = jnp.dtype(x.dtype).itemsize
    out3 = pl.pallas_call(
        _dma_copy_kernel,
        out_shape=jax.ShapeDtypeStruct((n_chunks, rows_per_chunk, L), x.dtype),
        grid=(n_chunks,),
        in_specs=[pl.BlockSpec(memory_space=pl.ANY)],    # raw HBM ref, no auto-DMA
        out_specs=pl.BlockSpec(memory_space=pl.ANY),     # raw HBM ref, written by DMA
        scratch_shapes=[pltpu.SemaphoreType.DMA(())],
        compiler_params=pltpu.CompilerParams(
            dimension_semantics=("parallel",),
        ),
        cost_estimate=pl.CostEstimate(
            flops=0, transcendentals=0, bytes_accessed=2 * total * itemsize),
    )(x3)

    return out3.reshape(N, C, H, W)


def shared_objects_to_batch_ref(x: jax.Array, num_objects: int) -> jax.Array:
    """Pure-JAX reference mirroring the torch rearrange exactly."""
    B, OC, H, W = x.shape
    C = OC // num_objects
    return x.reshape(B, num_objects, C, H, W).reshape(B * num_objects, C, H, W)


if __name__ == "__main__":
    key = jax.random.PRNGKey(0)
    B, num_objects, C, H, W = 2, 4, 4, 16, 16
    x = jax.random.normal(key, (B, num_objects * C, H, W), dtype=jnp.float32)

    out = shared_objects_to_batch(x, num_objects)
    out = jax.block_until_ready(out)

    ref = shared_objects_to_batch_ref(x, num_objects)
    assert out.shape == (B * num_objects, C, H, W), out.shape
    assert out.dtype == x.dtype, out.dtype
    assert jnp.array_equal(out, ref), float(jnp.max(jnp.abs(out - ref)))

    # The zero-copy view path must also match (preferred in real use).
    view = shared_objects_to_batch_view(x, num_objects)
    assert jnp.array_equal(view, ref)

    print("KERNEL_OK")
</pallas_src>

<mosaic_0001>
module attributes {stable_mosaic.version = 11 : i64} {
  func.func @_dma_copy_kernel(%arg0: i32, %arg1: memref<8x1x1024xf32, #tpu.memory_space<any>>, %arg2: memref<8x1x1024xf32, #tpu.memory_space<any>>, %arg3: memref<!tpu.dma_semaphore, #tpu.memory_space<semaphore_mem>>) attributes {dimension_semantics = [#tpu.dimension_semantics<parallel>], iteration_bounds = array<i64: 8>, scalar_prefetch = 0 : i64, scratch_operands = 1 : i64, tpu.core_type = #tpu.core_type<tc>, window_params = [{}, {}]} {
    %c0_i32 = arith.constant 0 : i32
    %c0_i32_0 = arith.constant 0 : i32
    %0 = tpu.memref_slice %arg1[%arg0, %c0_i32, %c0_i32_0] : memref<8x1x1024xf32, #tpu.memory_space<any>> -> memref<1x1x1024xf32, #tpu.memory_space<any>>
    %1 = tpu.memref_squeeze %0 : memref<1x1x1024xf32, #tpu.memory_space<any>> -> memref<1x1024xf32, #tpu.memory_space<any>>
    %c0_i32_1 = arith.constant 0 : i32
    %c0_i32_2 = arith.constant 0 : i32
    %2 = tpu.memref_slice %arg2[%arg0, %c0_i32_1, %c0_i32_2] : memref<8x1x1024xf32, #tpu.memory_space<any>> -> memref<1x1x1024xf32, #tpu.memory_space<any>>
    %3 = tpu.memref_squeeze %2 : memref<1x1x1024xf32, #tpu.memory_space<any>> -> memref<1x1024xf32, #tpu.memory_space<any>>
    tpu.enqueue_dma source(%1 : memref<1x1024xf32, #tpu.memory_space<any>>) target(%3 : memref<1x1024xf32, #tpu.memory_space<any>>) target_semaphore(%arg3 : memref<!tpu.dma_semaphore, #tpu.memory_space<semaphore_mem>>)
    %c0_i32_3 = arith.constant 0 : i32
    %c0_i32_4 = arith.constant 0 : i32
    %4 = tpu.memref_slice %arg1[%arg0, %c0_i32_3, %c0_i32_4] : memref<8x1x1024xf32, #tpu.memory_space<any>> -> memref<1x1x1024xf32, #tpu.memory_space<any>>
    %5 = tpu.memref_squeeze %4 : memref<1x1x1024xf32, #tpu.memory_space<any>> -> memref<1x1024xf32, #tpu.memory_space<any>>
    %c0_i32_5 = arith.constant 0 : i32
    %c0_i32_6 = arith.constant 0 : i32
    %6 = tpu.memref_slice %arg2[%arg0, %c0_i32_5, %c0_i32_6] : memref<8x1x1024xf32, #tpu.memory_space<any>> -> memref<1x1x1024xf32, #tpu.memory_space<any>>
    %7 = tpu.memref_squeeze %6 : memref<1x1x1024xf32, #tpu.memory_space<any>> -> memref<1x1024xf32, #tpu.memory_space<any>>
    tpu.wait_dma2 semaphore(%arg3 : memref<!tpu.dma_semaphore, #tpu.memory_space<semaphore_mem>>) src(%5 : memref<1x1024xf32, #tpu.memory_space<any>>) dst(%7 : memref<1x1024xf32, #tpu.memory_space<any>>)
    return
  }
}

</mosaic_0001>

<llo_original>
// kernel: tpu_custom_call.1
$region0: #{tpu_custom_call.1}
  #allocation0 [shape = 'u32[]', space=smem, size = 0x4, offset = 0x4, fixed_abs, tag = 'smem constant byte address 0x4 - core index']
  #allocation1 [shape = 'u32[144,128]{1,0:T(1,128)}', space=vmem, size = 0x12000, scoped, tag = 'internal scratch']
  #allocation2 [shape = 's32[1]{0}', space=sflag, size = 0x4, scoped, tag = 'scratch operand']
  #allocation3 [shape = 's32[]', space=sflag, size = 0x4, offset = 0, fixed_abs, tag = 'sflag constant byte address 0x0 - dummy sync flag']
  #allocation4 [shape = 'u32[0]{0}', space=smem, size = 0, offset = 0, fixed_abs, tag = 'smem constant byte address 0x0 - null']
  %s0 = inlined_call_operand.hbm [shape: f32[8,1,1024], index: 0, kind: input, shape index: {}]
  %s1 = inlined_call_operand.hbm [shape: f32[8,1,1024], index: 1, kind: output, shape index: {}]
  %s2 = sld [smem:[#allocation0]]
  $region9: #{tpu_custom_call.1} parent=0
    _
  %s4 = ssub.s32 1, %s2
  %s5 = scalar_select 0, %s4, %s2
  loop: start=0, step=1, limit=8
  $region2: #{tpu_custom_call.1} parent=0 // loop_pre_header
    _
  $region3: #{tpu_custom_call.1} parent=0 // loop_header
    %s7 = sphi 0, %s11
    %p8 = scmp.ge.s32.totalorder %s7, 8
  $region4: #{tpu_custom_call.1} parent=0 // loop_header_branch
    %10 = sbr.rel (%p8) target = $region8
  $region5: #{tpu_custom_call.1} parent=0 // loop_body
    %s12 = sadd.s32 %s7, 1
    %s13 = smul.u32 %s7, 8
    %s14 = smul.addr %s13, 16
    %s15 = scalar_lea.hbm %s0, %s14
    %s16 = smul.addr %s13, 16
    %s17 = scalar_lea.hbm %s1, %s16
    %s19 = sshll.u32 1, 14
    %s20 = sxor.u32 4294967295, %s19
    %s23 = sshll.u32 3, 24
    %s24 = sxor.u32 4294967295, %s23
    %s25 = sand.u32 0, %s24
    %s27 = sor.u32 %s25, 0
    %30 = dma.general %s15, 128, %s17, [#allocation2], [#allocation3], [#allocation4], %s27, 0
    %s31 = smul.u32 1, 8
    %s32 = sshll.u32 %s31, 4
    %33 = dma.done [#allocation2], %s32
  $region6: #{tpu_custom_call.1} parent=0 // loop_footer
    %s11 = sadd.s32 1, %s7
  $region7: #{tpu_custom_call.1} parent=0 // loop_footer_branch
    %6 = sbr.rel target = $region3
  $region8: #{tpu_custom_call.1} parent=0 // loop_exit
    _
  %34 = vsyncmov [#allocation2]
  %s35 = vpop.sfrf %34
  %p36 = scmp.eq.s32.totalorder %s35, 0
  %p37 = pneg %p36
  %39 = shalt.err (%p37)

</llo_original>
